<compile_context>
chip_gen: v5e
topology: v5e:2x2
jax: 0.10.0
libtpu: 0.0.40
codegen_flags: <defaults>
</compile_context>

<pallas_src>
import functools

import jax
import jax.numpy as jnp
from jax.experimental import pallas as pl
from jax.experimental.pallas import tpu as pltpu


INPUT_SIZE = 784          # 28 * 28
K_PAD = 896               # 7 * 128: lane-aligned K for layer 1 (padded in VMEM only)
TILE_B_CAP = 1024         # max batch rows per grid step


def _round_up(x, m):
    return (x + m - 1) // m * m


def _cdiv(a, b):
    return (a + b - 1) // b


def _leaky_relu(x, slope=0.2):
    return jnp.where(x > 0, x, slope * x)


def discriminator_kernel(x_ref,
                         w1_ref, b1_ref,
                         w2_ref, b2_ref,
                         w3_ref, b3_ref,
                         w4_ref, b4_ref,
                         out_ref,
                         xp_ref):
    # Stage the x tile into a lane-aligned bf16 scratch; the pad columns are
    # explicitly zeroed every step (safe under any grid/core partitioning).
    tb = x_ref.shape[0]
    xp_ref[:, :INPUT_SIZE] = x_ref[...].astype(jnp.bfloat16)
    xp_ref[:, INPUT_SIZE:] = jnp.zeros((tb, K_PAD - INPUT_SIZE), jnp.bfloat16)

    h = jnp.dot(xp_ref[...], w1_ref[...], preferred_element_type=jnp.float32)
    h = _leaky_relu(h + b1_ref[...])                       # (tb, 4H) f32
    # dropout(0.25): identity in eval mode

    h = jnp.dot(h.astype(w2_ref.dtype), w2_ref[...],
                preferred_element_type=jnp.float32)
    h = _leaky_relu(h + b2_ref[...])                       # (tb, 2H) f32

    h = jnp.dot(h.astype(w3_ref.dtype), w3_ref[...],
                preferred_element_type=jnp.float32)
    h = _leaky_relu(h + b3_ref[...])                       # (tb, H) f32

    # fc4 (output_size == 1): VPU multiply + lane reduce instead of an N=1
    # MXU matmul (uses XLU/VPU slack, keeps the MXU drain off the path).
    out = jnp.sum(h * w4_ref[...], axis=-1, keepdims=True) + b4_ref[...]
    out_ref[...] = out.astype(out_ref.dtype)


@functools.partial(jax.jit, static_argnames=("tile_b_cap",))
def discriminator_forward(x, params, *, tile_b_cap=TILE_B_CAP):
    """x: any shape that flattens to (B, 784), mirroring torch's x.view(-1, 784)."""
    x2d = x.reshape(-1, INPUT_SIZE)
    batch = x2d.shape[0]
    (w1, b1), (w2, b2), (w3, b3), (w4, b4) = params
    out_dim = w4.shape[1]
    assert out_dim == 1, "fc4 VPU-reduction path assumes output_size == 1"

    # Sublane-align the batch (host pad only when needed; <= 7 extra rows).
    b8 = _round_up(batch, 8)
    if b8 != batch:
        x2d = jnp.pad(x2d, ((0, b8 - batch), (0, 0)))

    # Tile selection: cap the tile, keep >= 2 grid steps when the batch allows
    # (v7x megacore shards the "parallel" batch axis), keep padding waste tiny.
    # Any ragged final block is handled by Pallas OOB masking, not host padding.
    n_tiles = max(2, _cdiv(b8, tile_b_cap))
    tile_b = min(b8, _round_up(_cdiv(b8, n_tiles), 8))
    grid = (_cdiv(b8, tile_b),)

    # ---- host-side weight prep (tiny; bf16 MXU operands, f32 biases) ----
    w1p = jnp.zeros((K_PAD, w1.shape[1]), jnp.bfloat16)
    w1p = w1p.at[:INPUT_SIZE, :].set(w1.astype(jnp.bfloat16))     # zero pad rows
    w2p = w2.astype(jnp.bfloat16)
    w3p = w3.astype(jnp.bfloat16)
    w4p = w4.reshape(1, -1).astype(jnp.float32)                   # (1, H) row
    b1p = b1.reshape(1, -1).astype(jnp.float32)
    b2p = b2.reshape(1, -1).astype(jnp.float32)
    b3p = b3.reshape(1, -1).astype(jnp.float32)
    b4p = b4.reshape(1, -1).astype(jnp.float32)
    weights = [w1p, b1p, w2p, b2p, w3p, b3p, w4p, b4p]

    # Weights/biases: full-array blocks with constant index_map (VMEM-resident).
    def const_spec(arr):
        return pl.BlockSpec(arr.shape, lambda i: (0, 0))

    in_specs = [pl.BlockSpec((tile_b, INPUT_SIZE), lambda i: (i, 0))]
    in_specs += [const_spec(a) for a in weights]
    out_specs = pl.BlockSpec((tile_b, out_dim), lambda i: (i, 0))

    # ---- VMEM budget (clamped to smallest per-gen scoped default) ----
    weight_bytes = sum(int(a.size) * a.dtype.itemsize for a in weights)
    x_tile_bytes = tile_b * INPUT_SIZE * x2d.dtype.itemsize       # double-buffered
    out_tile_bytes = tile_b * out_dim * 4                         # double-buffered
    scratch_bytes = tile_b * K_PAD * 2                            # bf16 staging
    act_bytes = tile_b * w1.shape[1] * 4 * 3                      # f32 intermediates
    vmem_limit = int(2 * (x_tile_bytes + out_tile_bytes) + 2 * weight_bytes
                     + scratch_bytes + act_bytes + (4 << 20))
    vmem_limit = min(vmem_limit, 32 << 20)

    h4, h2, h1 = w1.shape[1], w2.shape[1], w3.shape[1]
    flops = 2 * b8 * (K_PAD * h4 + h4 * h2 + h2 * h1 + h1 * out_dim)
    bytes_accessed = int(x2d.size * x2d.dtype.itemsize + weight_bytes
                         + b8 * out_dim * 4)
    cost = pl.CostEstimate(flops=flops, transcendentals=0,
                           bytes_accessed=bytes_accessed)

    out_padded = pl.pallas_call(
        discriminator_kernel,
        out_shape=jax.ShapeDtypeStruct((b8, out_dim), jnp.float32),
        grid=grid,
        in_specs=in_specs,
        out_specs=out_specs,
        scratch_shapes=[pltpu.VMEM((tile_b, K_PAD), jnp.bfloat16)],
        compiler_params=pltpu.CompilerParams(
            dimension_semantics=("parallel",),
            vmem_limit_bytes=vmem_limit),
        cost_estimate=cost,
    )(x2d, *weights)

    return out_padded[:batch]


def init_params(key, input_size=INPUT_SIZE, hidden_dim=32, output_size=1):
    """Deterministic synthetic parameters (PyTorch nn.Linear-like uniform init).

    Weights stored as (in_features, out_features) so the kernel computes x @ W + b.
    """
    dims = [input_size, hidden_dim * 4, hidden_dim * 2, hidden_dim, output_size]
    params = []
    for i in range(4):
        fan_in, fan_out = dims[i], dims[i + 1]
        key, kw, kb = jax.random.split(key, 3)
        bound = 1.0 / jnp.sqrt(fan_in)
        w = jax.random.uniform(kw, (fan_in, fan_out), jnp.float32, -bound, bound)
        b = jax.random.uniform(kb, (1, fan_out), jnp.float32, -bound, bound)
        params.append((w, b))
    return params


if __name__ == "__main__":
    key = jax.random.PRNGKey(0)
    key, kx = jax.random.split(key)

    batch = 2
    x = jax.random.normal(kx, (batch, 1, 28, 28), jnp.float32)  # MNIST-like NCHW

    params = init_params(key, input_size=INPUT_SIZE, hidden_dim=32, output_size=1)

    out = discriminator_forward(x, params)
    jax.block_until_ready(out)

    # Pure-JAX f32 reference (dropout = identity in eval mode).
    def ref(x, params):
        h = x.reshape(-1, INPUT_SIZE)
        for i, (w, b) in enumerate(params):
            h = h @ w + b
            if i < 3:
                h = jnp.where(h > 0, h, 0.2 * h)
        return h

    ref_out = ref(x, params)
    assert out.shape == (batch, 1), out.shape
    # bf16 matmul operands with f32 accumulation -> loosened tolerance.
    assert jnp.allclose(out, ref_out, atol=2e-2, rtol=2e-2), "mismatch vs reference"

    print("KERNEL_OK")
</pallas_src>

<mosaic_0001>
module attributes {stable_mosaic.version = 11 : i64} {
  func.func @discriminator_kernel(%arg0: i32, %arg1: memref<8x784xf32, #tpu.memory_space<vmem>>, %arg2: memref<896x128xbf16, #tpu.memory_space<vmem>>, %arg3: memref<1x128xf32, #tpu.memory_space<vmem>>, %arg4: memref<128x64xbf16, #tpu.memory_space<vmem>>, %arg5: memref<1x64xf32, #tpu.memory_space<vmem>>, %arg6: memref<64x32xbf16, #tpu.memory_space<vmem>>, %arg7: memref<1x32xf32, #tpu.memory_space<vmem>>, %arg8: memref<1x32xf32, #tpu.memory_space<vmem>>, %arg9: memref<1x1xf32, #tpu.memory_space<vmem>>, %arg10: memref<8x1xf32, #tpu.memory_space<vmem>>, %arg11: memref<8x896xbf16, #tpu.memory_space<vmem>>) attributes {dimension_semantics = [#tpu.dimension_semantics<parallel>], iteration_bounds = array<i64: 1>, scalar_prefetch = 0 : i64, scratch_operands = 1 : i64, tpu.core_type = #tpu.core_type<tc>, window_params = [{transform_indices = @transform_0, window_bounds = array<i64: 8, 784>}, {pipeline_mode = #tpu.pipeline_mode<synchronous>, transform_indices = @transform_1, window_bounds = array<i64: 896, 128>}, {pipeline_mode = #tpu.pipeline_mode<synchronous>, transform_indices = @transform_2, window_bounds = array<i64: 1, 128>}, {pipeline_mode = #tpu.pipeline_mode<synchronous>, transform_indices = @transform_3, window_bounds = array<i64: 128, 64>}, {pipeline_mode = #tpu.pipeline_mode<synchronous>, transform_indices = @transform_4, window_bounds = array<i64: 1, 64>}, {pipeline_mode = #tpu.pipeline_mode<synchronous>, transform_indices = @transform_5, window_bounds = array<i64: 64, 32>}, {pipeline_mode = #tpu.pipeline_mode<synchronous>, transform_indices = @transform_6, window_bounds = array<i64: 1, 32>}, {pipeline_mode = #tpu.pipeline_mode<synchronous>, transform_indices = @transform_7, window_bounds = array<i64: 1, 32>}, {pipeline_mode = #tpu.pipeline_mode<synchronous>, transform_indices = @transform_8, window_bounds = array<i64: 1, 1>}, {transform_indices = @transform_9, window_bounds = array<i64: 8, 1>}]} {
    %c0 = arith.constant 0 : index
    %c0_0 = arith.constant 0 : index
    %0 = vector.load %arg1[%c0, %c0_0] : memref<8x784xf32, #tpu.memory_space<vmem>>, vector<8x784xf32>
    %1 = arith.truncf %0 : vector<8x784xf32> to vector<8x784xbf16>
    %c0_1 = arith.constant 0 : index
    %c0_2 = arith.constant 0 : index
    %2 = vector.load %arg11[%c0_1, %c0_2] : memref<8x896xbf16, #tpu.memory_space<vmem>>, vector<8x784xbf16>
    tpu.vector_store %arg11[%c0_1, %c0_2], %1 {strides = array<i32>} : memref<8x896xbf16, #tpu.memory_space<vmem>>, vector<8x784xbf16>,
    %cst = arith.constant 0.000000e+00 : bf16
    %3 = vector.broadcast %cst : bf16 to vector<8x112xbf16>
    %c0_3 = arith.constant 0 : index
    %c784 = arith.constant 784 : index
    %4 = vector.load %arg11[%c0_3, %c784] : memref<8x896xbf16, #tpu.memory_space<vmem>>, vector<8x112xbf16>
    tpu.vector_store %arg11[%c0_3, %c784], %3 {strides = array<i32>} : memref<8x896xbf16, #tpu.memory_space<vmem>>, vector<8x112xbf16>,
    %c0_4 = arith.constant 0 : index
    %c0_5 = arith.constant 0 : index
    %5 = vector.load %arg11[%c0_4, %c0_5] : memref<8x896xbf16, #tpu.memory_space<vmem>>, vector<8x896xbf16>
    %c0_6 = arith.constant 0 : index
    %c0_7 = arith.constant 0 : index
    %6 = vector.load %arg2[%c0_6, %c0_7] : memref<896x128xbf16, #tpu.memory_space<vmem>>, vector<896x128xbf16>
    %cst_8 = arith.constant dense<0.000000e+00> : vector<8x128xf32>
    %7 = tpu.matmul %5, %6, %cst_8 {dimension_numbers = #tpu.dot_dimension_numbers<[1], [0], [0], [1], [0, 0, 1, 1], [], []>} : vector<8x896xbf16>, vector<896x128xbf16>, vector<8x128xf32> -> vector<8x128xf32>
    %c0_9 = arith.constant 0 : index
    %c0_10 = arith.constant 0 : index
    %8 = vector.load %arg3[%c0_9, %c0_10] : memref<1x128xf32, #tpu.memory_space<vmem>>, vector<1x128xf32>
    %9 = vector.broadcast %8 : vector<1x128xf32> to vector<8x128xf32>
    %10 = arith.addf %7, %9 : vector<8x128xf32>
    %cst_11 = arith.constant 0.000000e+00 : f32
    %11 = vector.broadcast %cst_11 : f32 to vector<8x128xf32>
    %12 = arith.cmpf ogt, %10, %11 : vector<8x128xf32>
    %cst_12 = arith.constant 2.000000e-01 : f32
    %13 = vector.broadcast %cst_12 : f32 to vector<8x128xf32>
    %14 = arith.mulf %13, %10 : vector<8x128xf32>
    %15 = arith.select %12, %10, %14 : vector<8x128xi1>, vector<8x128xf32>
    %16 = arith.truncf %15 : vector<8x128xf32> to vector<8x128xbf16>
    %c0_13 = arith.constant 0 : index
    %c0_14 = arith.constant 0 : index
    %17 = vector.load %arg4[%c0_13, %c0_14] : memref<128x64xbf16, #tpu.memory_space<vmem>>, vector<128x64xbf16>
    %cst_15 = arith.constant dense<0.000000e+00> : vector<8x64xf32>
    %18 = tpu.matmul %16, %17, %cst_15 {dimension_numbers = #tpu.dot_dimension_numbers<[1], [0], [0], [1], [0, 0, 1, 1], [], []>} : vector<8x128xbf16>, vector<128x64xbf16>, vector<8x64xf32> -> vector<8x64xf32>
    %c0_16 = arith.constant 0 : index
    %c0_17 = arith.constant 0 : index
    %19 = vector.load %arg5[%c0_16, %c0_17] : memref<1x64xf32, #tpu.memory_space<vmem>>, vector<1x64xf32>
    %20 = vector.broadcast %19 : vector<1x64xf32> to vector<8x64xf32>
    %21 = arith.addf %18, %20 : vector<8x64xf32>
    %cst_18 = arith.constant 0.000000e+00 : f32
    %22 = vector.broadcast %cst_18 : f32 to vector<8x64xf32>
    %23 = arith.cmpf ogt, %21, %22 : vector<8x64xf32>
    %cst_19 = arith.constant 2.000000e-01 : f32
    %24 = vector.broadcast %cst_19 : f32 to vector<8x64xf32>
    %25 = arith.mulf %24, %21 : vector<8x64xf32>
    %26 = arith.select %23, %21, %25 : vector<8x64xi1>, vector<8x64xf32>
    %27 = arith.truncf %26 : vector<8x64xf32> to vector<8x64xbf16>
    %c0_20 = arith.constant 0 : index
    %c0_21 = arith.constant 0 : index
    %28 = vector.load %arg6[%c0_20, %c0_21] : memref<64x32xbf16, #tpu.memory_space<vmem>>, vector<64x32xbf16>
    %cst_22 = arith.constant dense<0.000000e+00> : vector<8x32xf32>
    %29 = tpu.matmul %27, %28, %cst_22 {dimension_numbers = #tpu.dot_dimension_numbers<[1], [0], [0], [1], [0, 0, 1, 1], [], []>} : vector<8x64xbf16>, vector<64x32xbf16>, vector<8x32xf32> -> vector<8x32xf32>
    %c0_23 = arith.constant 0 : index
    %c0_24 = arith.constant 0 : index
    %30 = vector.load %arg7[%c0_23, %c0_24] : memref<1x32xf32, #tpu.memory_space<vmem>>, vector<1x32xf32>
    %31 = vector.broadcast %30 : vector<1x32xf32> to vector<8x32xf32>
    %32 = arith.addf %29, %31 : vector<8x32xf32>
    %cst_25 = arith.constant 0.000000e+00 : f32
    %33 = vector.broadcast %cst_25 : f32 to vector<8x32xf32>
    %34 = arith.cmpf ogt, %32, %33 : vector<8x32xf32>
    %cst_26 = arith.constant 2.000000e-01 : f32
    %35 = vector.broadcast %cst_26 : f32 to vector<8x32xf32>
    %36 = arith.mulf %35, %32 : vector<8x32xf32>
    %37 = arith.select %34, %32, %36 : vector<8x32xi1>, vector<8x32xf32>
    %c0_27 = arith.constant 0 : index
    %c0_28 = arith.constant 0 : index
    %38 = vector.load %arg8[%c0_27, %c0_28] : memref<1x32xf32, #tpu.memory_space<vmem>>, vector<1x32xf32>
    %39 = vector.broadcast %38 : vector<1x32xf32> to vector<8x32xf32>
    %40 = arith.mulf %37, %39 : vector<8x32xf32>
    %cst_29 = arith.constant dense<0.000000e+00> : vector<8xf32>
    %41 = vector.multi_reduction <add>, %40, %cst_29 [1] : vector<8x32xf32> to vector<8xf32>
    %42 = vector.shape_cast %41 : vector<8xf32> to vector<8x1xf32>
    %c0_30 = arith.constant 0 : index
    %c0_31 = arith.constant 0 : index
    %43 = vector.load %arg9[%c0_30, %c0_31] : memref<1x1xf32, #tpu.memory_space<vmem>>, vector<1x1xf32>
    %44 = vector.broadcast %43 : vector<1x1xf32> to vector<8x1xf32>
    %45 = arith.addf %42, %44 : vector<8x1xf32>
    %c0_32 = arith.constant 0 : index
    %c0_33 = arith.constant 0 : index
    %46 = vector.load %arg10[%c0_32, %c0_33] : memref<8x1xf32, #tpu.memory_space<vmem>>, vector<8x1xf32>
    tpu.vector_store %arg10[%c0_32, %c0_33], %45 {strides = array<i32>} : memref<8x1xf32, #tpu.memory_space<vmem>>, vector<8x1xf32>,
    return
  }
  func.func @transform_0(%arg0: i32) -> (i32, i32) {
    %c0_i32 = arith.constant 0 : i32
    %c0_i32_0 = arith.constant 0 : i32
    return %arg0, %c0_i32 : i32, i32
  }
  func.func @transform_1(%arg0: i32) -> (i32, i32) {
    %c0_i32 = arith.constant 0 : i32
    %c0_i32_0 = arith.constant 0 : i32
    %c0_i32_1 = arith.constant 0 : i32
    return %c0_i32, %c0_i32_0 : i32, i32
  }
  func.func @transform_2(%arg0: i32) -> (i32, i32) {
    %c0_i32 = arith.constant 0 : i32
    %c0_i32_0 = arith.constant 0 : i32
    %c0_i32_1 = arith.constant 0 : i32
    return %c0_i32, %c0_i32_0 : i32, i32
  }
  func.func @transform_3(%arg0: i32) -> (i32, i32) {
    %c0_i32 = arith.constant 0 : i32
    %c0_i32_0 = arith.constant 0 : i32
    %c0_i32_1 = arith.constant 0 : i32
    return %c0_i32, %c0_i32_0 : i32, i32
  }
  func.func @transform_4(%arg0: i32) -> (i32, i32) {
    %c0_i32 = arith.constant 0 : i32
    %c0_i32_0 = arith.constant 0 : i32
    %c0_i32_1 = arith.constant 0 : i32
    return %c0_i32, %c0_i32_0 : i32, i32
  }
  func.func @transform_5(%arg0: i32) -> (i32, i32) {
    %c0_i32 = arith.constant 0 : i32
    %c0_i32_0 = arith.constant 0 : i32
    %c0_i32_1 = arith.constant 0 : i32
    return %c0_i32, %c0_i32_0 : i32, i32
  }
  func.func @transform_6(%arg0: i32) -> (i32, i32) {
    %c0_i32 = arith.constant 0 : i32
    %c0_i32_0 = arith.constant 0 : i32
    %c0_i32_1 = arith.constant 0 : i32
    return %c0_i32, %c0_i32_0 : i32, i32
  }
  func.func @transform_7(%arg0: i32) -> (i32, i32) {
    %c0_i32 = arith.constant 0 : i32
    %c0_i32_0 = arith.constant 0 : i32
    %c0_i32_1 = arith.constant 0 : i32
    return %c0_i32, %c0_i32_0 : i32, i32
  }
  func.func @transform_8(%arg0: i32) -> (i32, i32) {
    %c0_i32 = arith.constant 0 : i32
    %c0_i32_0 = arith.constant 0 : i32
    %c0_i32_1 = arith.constant 0 : i32
    return %c0_i32, %c0_i32_0 : i32, i32
  }
  func.func @transform_9(%arg0: i32) -> (i32, i32) {
    %c0_i32 = arith.constant 0 : i32
    %c0_i32_0 = arith.constant 0 : i32
    return %arg0, %c0_i32 : i32, i32
  }
}

</mosaic_0001>

<llo_original>
// kernel: discriminator_forward.1
$region0: #{discriminator_forward.1}
  #allocation0 [shape = 'u32[]', space=smem, size = 0x4, offset = 0x4, fixed_abs, tag = 'smem constant byte address 0x4 - core index']
  #allocation1 [shape = 'u32[72,128]{1,0:T(1,128)}', space=vmem, size = 0x9000, scoped, tag = 'internal scratch']
  #allocation2 [shape = 'bf16[8,896]{1,0:T(8,128)(2,1)}', space=vmem, size = 0x3800, scoped, tag = 'scratch operand']
  #allocation3 [shape = 'f32[1,1]{1,0:T(1,128)S(1)}', space=vmem, size = 0x200, scoped, tag = 'scoped memory for discriminator_forward.1']
  %s0 = inlined_call_operand.vmem [shape: f32[8,784], index: 0, kind: input, shape index: {}]
  %s1 = inlined_call_operand.vmem [shape: bf16[896,128], index: 1, kind: input, shape index: {}]
  %s2 = inlined_call_operand.vmem [shape: f32[1,128], index: 2, kind: input, shape index: {}]
  %s3 = inlined_call_operand.vmem [shape: bf16[128,64], index: 3, kind: input, shape index: {}]
  %s4 = inlined_call_operand.vmem [shape: f32[1,64], index: 4, kind: input, shape index: {}]
  %s5 = inlined_call_operand.vmem [shape: bf16[64,32], index: 5, kind: input, shape index: {}]
  %s6 = inlined_call_operand.vmem [shape: f32[1,32], index: 6, kind: input, shape index: {}]
  %s7 = inlined_call_operand.vmem [shape: f32[1,32], index: 7, kind: input, shape index: {}]
  %s8 = inlined_call_operand.<no memory space> [shape: f32[1,1], index: 8, kind: input, shape index: {}]
  %s9 = inlined_call_operand.vmem [shape: f32[8,1], index: 9, kind: output, shape index: {}]
  %s10 = sld [smem:[#allocation0]]
  $region46: #{discriminator_forward.1} parent=0
    _
  %s12 = ssub.s32 1, %s10
  %s13 = scalar_select 0, %s12, %s10
  %v14 = vstv %s8
  %15 = vst [vmem:[#allocation3] sm:$0x1] %v14
  // Predicated region
  $region2: #{discriminator_forward.1} parent=0 // pred_check
    _
  $region3: #{discriminator_forward.1} parent=0 // pred_check_branch
    %17 = sbr.rel (0) target = $region5
  $region4: #{discriminator_forward.1} parent=0 // pred_region
    _
  $region5: #{discriminator_forward.1} parent=0 // pred_fallthru
    _
  // Predicated region
  $region6: #{discriminator_forward.1} parent=0 // pred_check
    _
  $region7: #{discriminator_forward.1} parent=0 // pred_check_branch
    %19 = sbr.rel (0) target = $region9
  $region8: #{discriminator_forward.1} parent=0 // pred_region
    _
  $region9: #{discriminator_forward.1} parent=0 // pred_fallthru
    _
  // Predicated region
  $region10: #{discriminator_forward.1} parent=0 // pred_check
    _
  $region11: #{discriminator_forward.1} parent=0 // pred_check_branch
    %21 = sbr.rel (0) target = $region13
  $region12: #{discriminator_forward.1} parent=0 // pred_region
    _
  $region13: #{discriminator_forward.1} parent=0 // pred_fallthru
    _
  // Predicated region
  $region14: #{discriminator_forward.1} parent=0 // pred_check
    _
  $region15: #{discriminator_forward.1} parent=0 // pred_check_branch
    %23 = sbr.rel (0) target = $region17
  $region16: #{discriminator_forward.1} parent=0 // pred_region
    _
  $region17: #{discriminator_forward.1} parent=0 // pred_fallthru
    _
  // Predicated region
  $region18: #{discriminator_forward.1} parent=0 // pred_check
    _
  $region19: #{discriminator_forward.1} parent=0 // pred_check_branch
    %25 = sbr.rel (0) target = $region21
  $region20: #{discriminator_forward.1} parent=0 // pred_region
    _
  $region21: #{discriminator_forward.1} parent=0 // pred_fallthru
    _
  // Predicated region
  $region22: #{discriminator_forward.1} parent=0 // pred_check
    _
  $region23: #{discriminator_forward.1} parent=0 // pred_check_branch
    %27 = sbr.rel (0) target = $region25
  $region24: #{discriminator_forward.1} parent=0 // pred_region
    _
  $region25: #{discriminator_forward.1} parent=0 // pred_fallthru
    _
  // Predicated region
  $region26: #{discriminator_forward.1} parent=0 // pred_check
    _
  $region27: #{discriminator_forward.1} parent=0 // pred_check_branch
    %29 = sbr.rel (0) target = $region29
  $region28: #{discriminator_forward.1} parent=0 // pred_region
    _
  $region29: #{discriminator_forward.1} parent=0 // pred_fallthru
    _
  // Predicated region
  $region30: #{discriminator_forward.1} parent=0 // pred_check
    _
  $region31: #{discriminator_forward.1} parent=0 // pred_check_branch
    %31 = sbr.rel (0) target = $region33
  $region32: #{discriminator_forward.1} parent=0 // pred_region
    _
  $region33: #{discriminator_forward.1} parent=0 // pred_fallthru
    _
  // Predicated region
  $region34: #{discriminator_forward.1} parent=0 // pred_check
    _
  $region35: #{discriminator_forward.1} parent=0 // pred_check_branch
    %33 = sbr.rel (0) target = $region37
  $region36: #{discriminator_forward.1} parent=0 // pred_region
    _
  $region37: #{discriminator_forward.1} parent=0 // pred_fallthru
    _
  %v35 = vld [vmem:[%s0] sm:$0xff]
  %v36 = vld [vmem:[%s0 + $0x8] sm:$0xff]
  %v37 = vld [vmem:[%s0 + $0x10] sm:$0xff]
  %v38 = vld [vmem:[%s0 + $0x18] sm:$0xff]
  %v39 = vld [vmem:[%s0 + $0x20] sm:$0xff]
  %v40 = vld [vmem:[%s0 + $0x28] sm:$0xff]
  %v41 = vld [vmem:[%s0 + $0x30] sm:$0xff]
  %v42 = vpack.c.bf16 %v36, %v35
  %v43 = vpack.c.bf16 %v38, %v37
  %v44 = vpack.c.bf16 %v40, %v39
  %v45 = vpack.c.bf16 %v41, %v41
  %46 = vst [vmem:[#allocation2] sm:$0xff] %v42
  %47 = vst [vmem:[#allocation2 + $0x8] sm:$0xff] %v43
  %48 = vst [vmem:[#allocation2 + $0x10] sm:$0xff] %v44
  %vm49 = vcmask 125952
  %50 = vst.msk [vmem:[#allocation2 + $0x18] sm:$0xf] %vm49, %v45
  %vm51 = vcmask 1043584
  %52 = vst.msk [vmem:[#allocation2 + $0x18] sm:$0xf] %vm51, 0
  %v53 = vld [vmem:[#allocation2] sm:$0xff]
  %v54 = vld [vmem:[#allocation2 + $0x8] sm:$0xff]
  %v55 = vld [vmem:[#allocation2 + $0x10] sm:$0xff]
  %v56 = vld [vmem:[#allocation2 + $0x18] sm:$0xf]
  %v57 = vld [vmem:[%s1] sm:$0xf]
  %v58 = vld [vmem:[%s1 + $0x4] sm:$0xf]
  %v59 = vld [vmem:[%s1 + $0x8] sm:$0xf]
  %v60 = vld [vmem:[%s1 + $0xc] sm:$0xf]
  %v61 = vld [vmem:[%s1 + $0x10] sm:$0xf]
  %v62 = vld [vmem:[%s1 + $0x14] sm:$0xf]
  %v63 = vld [vmem:[%s1 + $0x18] sm:$0xf]
  %v64 = vld [vmem:[%s1 + $0x1c] sm:$0xf]
  %v65 = vld [vmem:[%s1 + $0x20] sm:$0xf]
  %v66 = vld [vmem:[%s1 + $0x24] sm:$0xf]
  %v67 = vld [vmem:[%s1 + $0x28] sm:$0xf]
  %v68 = vld [vmem:[%s1 + $0x2c] sm:$0xf]
  %v69 = vld [vmem:[%s1 + $0x30] sm:$0xf]
  %v70 = vld [vmem:[%s1 + $0x34] sm:$0xf]
  %v71 = vld [vmem:[%s1 + $0x38] sm:$0xf]
  %v72 = vld [vmem:[%s1 + $0x3c] sm:$0xf]
  %v73 = vld [vmem:[%s1 + $0x40] sm:$0xf]
  %v74 = vld [vmem:[%s1 + $0x44] sm:$0xf]
  %v75 = vld [vmem:[%s1 + $0x48] sm:$0xf]
  %v76 = vld [vmem:[%s1 + $0x4c] sm:$0xf]
  %v77 = vld [vmem:[%s1 + $0x50] sm:$0xf]
  %v78 = vld [vmem:[%s1 + $0x54] sm:$0xf]
  %v79 = vld [vmem:[%s1 + $0x58] sm:$0xf]
  %v80 = vld [vmem:[%s1 + $0x5c] sm:$0xf]
  %v81 = vld [vmem:[%s1 + $0x60] sm:$0xf]
  %v82 = vld [vmem:[%s1 + $0x64] sm:$0xf]
  %v83 = vld [vmem:[%s1 + $0x68] sm:$0xf]
  %v84 = vld [vmem:[%s1 + $0x6c] sm:$0xf]
  %v85 = vld [vmem:[%s1 + $0x70] sm:$0xf]
  %v86 = vld [vmem:[%s1 + $0x74] sm:$0xf]
  %v87 = vld [vmem:[%s1 + $0x78] sm:$0xf]
  %v88 = vld [vmem:[%s1 + $0x7c] sm:$0xf]
  %v89 = vld [vmem:[%s1 + $0x80] sm:$0xf]
  %v90 = vld [vmem:[%s1 + $0x84] sm:$0xf]
  %v91 = vld [vmem:[%s1 + $0x88] sm:$0xf]
  %v92 = vld [vmem:[%s1 + $0x8c] sm:$0xf]
  %v93 = vld [vmem:[%s1 + $0x90] sm:$0xf]
  %v94 = vld [vmem:[%s1 + $0x94] sm:$0xf]
  %v95 = vld [vmem:[%s1 + $0x98] sm:$0xf]
  %v96 = vld [vmem:[%s1 + $0x9c] sm:$0xf]
  %v97 = vld [vmem:[%s1 + $0xa0] sm:$0xf]
  %v98 = vld [vmem:[%s1 + $0xa4] sm:$0xf]
  %v99 = vld [vmem:[%s1 + $0xa8] sm:$0xf]
  %v100 = vld [vmem:[%s1 + $0xac] sm:$0xf]
  %v101 = vld [vmem:[%s1 + $0xb0] sm:$0xf]
  %v102 = vld [vmem:[%s1 + $0xb4] sm:$0xf]
  %v103 = vld [vmem:[%s1 + $0xb8] sm:$0xf]
  %v104 = vld [vmem:[%s1 + $0xbc] sm:$0xf]
  %v105 = vld [vmem:[%s1 + $0xc0] sm:$0xf]
  %v106 = vld [vmem:[%s1 + $0xc4] sm:$0xf]
  %v107 = vld [vmem:[%s1 + $0xc8] sm:$0xf]
  %v108 = vld [vmem:[%s1 + $0xcc] sm:$0xf]
  %v109 = vld [vmem:[%s1 + $0xd0] sm:$0xf]
  %v110 = vld [vmem:[%s1 + $0xd4] sm:$0xf]
  %v111 = vld [vmem:[%s1 + $0xd8] sm:$0xf]
  %v112 = vld [vmem:[%s1 + $0xdc] sm:$0xf]
  %v113 = vld [vmem:[%s1 + $0xe0] sm:$0xf]
  %v114 = vld [vmem:[%s1 + $0xe4] sm:$0xf]
  %v115 = vld [vmem:[%s1 + $0xe8] sm:$0xf]
  %v116 = vld [vmem:[%s1 + $0xec] sm:$0xf]
  %v117 = vld [vmem:[%s1 + $0xf0] sm:$0xf]
  %v118 = vld [vmem:[%s1 + $0xf4] sm:$0xf]
  %v119 = vld [vmem:[%s1 + $0xf8] sm:$0xf]
  %v120 = vld [vmem:[%s1 + $0xfc] sm:$0xf]
  %v121 = vld [vmem:[%s1 + $0x100] sm:$0xf]
  %v122 = vld [vmem:[%s1 + $0x104] sm:$0xf]
  %v123 = vld [vmem:[%s1 + $0x108] sm:$0xf]
  %v124 = vld [vmem:[%s1 + $0x10c] sm:$0xf]
  %v125 = vld [vmem:[%s1 + $0x110] sm:$0xf]
  %v126 = vld [vmem:[%s1 + $0x114] sm:$0xf]
  %v127 = vld [vmem:[%s1 + $0x118] sm:$0xf]
  %v128 = vld [vmem:[%s1 + $0x11c] sm:$0xf]
  %v129 = vld [vmem:[%s1 + $0x120] sm:$0xf]
  %v130 = vld [vmem:[%s1 + $0x124] sm:$0xf]
  %v131 = vld [vmem:[%s1 + $0x128] sm:$0xf]
  %v132 = vld [vmem:[%s1 + $0x12c] sm:$0xf]
  %v133 = vld [vmem:[%s1 + $0x130] sm:$0xf]
  %v134 = vld [vmem:[%s1 + $0x134] sm:$0xf]
  %v135 = vld [vmem:[%s1 + $0x138] sm:$0xf]
  %v136 = vld [vmem:[%s1 + $0x13c] sm:$0xf]
  %v137 = vld [vmem:[%s1 + $0x140] sm:$0xf]
  %v138 = vld [vmem:[%s1 + $0x144] sm:$0xf]
  %v139 = vld [vmem:[%s1 + $0x148] sm:$0xf]
  %v140 = vld [vmem:[%s1 + $0x14c] sm:$0xf]
  %v141 = vld [vmem:[%s1 + $0x150] sm:$0xf]
  %v142 = vld [vmem:[%s1 + $0x154] sm:$0xf]
  %v143 = vld [vmem:[%s1 + $0x158] sm:$0xf]
  %v144 = vld [vmem:[%s1 + $0x15c] sm:$0xf]
  %v145 = vld [vmem:[%s1 + $0x160] sm:$0xf]
  %v146 = vld [vmem:[%s1 + $0x164] sm:$0xf]
  %v147 = vld [vmem:[%s1 + $0x168] sm:$0xf]
  %v148 = vld [vmem:[%s1 + $0x16c] sm:$0xf]
  %v149 = vld [vmem:[%s1 + $0x170] sm:$0xf]
  %v150 = vld [vmem:[%s1 + $0x174] sm:$0xf]
  %v151 = vld [vmem:[%s1 + $0x178] sm:$0xf]
  %v152 = vld [vmem:[%s1 + $0x17c] sm:$0xf]
  %v153 = vld [vmem:[%s1 + $0x180] sm:$0xf]
  %v154 = vld [vmem:[%s1 + $0x184] sm:$0xf]
  %v155 = vld [vmem:[%s1 + $0x188] sm:$0xf]
  %v156 = vld [vmem:[%s1 + $0x18c] sm:$0xf]
  %v157 = vld [vmem:[%s1 + $0x190] sm:$0xf]
  %v158 = vld [vmem:[%s1 + $0x194] sm:$0xf]
  %v159 = vld [vmem:[%s1 + $0x198] sm:$0xf]
  %v160 = vld [vmem:[%s1 + $0x19c] sm:$0xf]
  %v161 = vld [vmem:[%s1 + $0x1a0] sm:$0xf]
  %v162 = vld [vmem:[%s1 + $0x1a4] sm:$0xf]
  %v163 = vld [vmem:[%s1 + $0x1a8] sm:$0xf]
  %v164 = vld [vmem:[%s1 + $0x1ac] sm:$0xf]
  %v165 = vld [vmem:[%s1 + $0x1b0] sm:$0xf]
  %v166 = vld [vmem:[%s1 + $0x1b4] sm:$0xf]
  %v167 = vld [vmem:[%s1 + $0x1b8] sm:$0xf]
  %v168 = vld [vmem:[%s1 + $0x1bc] sm:$0xf]
  %v169 = vld [vmem:[%s2] sm:$0x1]
  %v171 = vperm.slane %v169, 0
  %v177 = vunpack.c.l.b16 %v53
  %v178 = vunpack.c.h.b16 %v53
  %v179 = vunpack.c.l.b16 %v54
  %v180 = vunpack.c.h.b16 %v54
  %v181 = vunpack.c.l.b16 %v55
  %v182 = vunpack.c.h.b16 %v55
  %v183 = vunpack.c.l.b16 %v56
  %v184 = vpack.c.b16 %v177, %v177
  %v185 = vpack.c.b16 %v178, %v178
  %v186 = vpack.c.b16 %v179, %v179
  %v187 = vpack.c.b16 %v180, %v180
  %v188 = vpack.c.b16 %v181, %v181
  %v189 = vpack.c.b16 %v182, %v182
  %v190 = vpack.c.b16 %v183, %v183
  %v310 = vunpack.c.l.b16 %v57
  %v311 = vunpack.c.l.b16 %v58
  %v312 = vunpack.c.l.b16 %v59
  %v313 = vunpack.c.l.b16 %v60
  %v314 = vunpack.c.l.b16 %v61
  %v315 = vunpack.c.l.b16 %v62
  %v316 = vunpack.c.l.b16 %v63
  %v317 = vunpack.c.l.b16 %v64
  %v318 = vunpack.c.l.b16 %v65
  %v319 = vunpack.c.l.b16 %v66
  %v320 = vunpack.c.l.b16 %v67
  %v321 = vunpack.c.l.b16 %v68
  %v322 = vunpack.c.l.b16 %v69
  %v323 = vunpack.c.l.b16 %v70
  %v324 = vunpack.c.l.b16 %v71
  %v325 = vunpack.c.l.b16 %v72
  %v326 = vunpack.c.l.b16 %v73
  %v327 = vunpack.c.l.b16 %v74
  %v328 = vunpack.c.l.b16 %v75
  %v329 = vunpack.c.l.b16 %v76
  %v330 = vunpack.c.l.b16 %v77
  %v331 = vunpack.c.l.b16 %v78
  %v332 = vunpack.c.l.b16 %v79
  %v333 = vunpack.c.l.b16 %v80
  %v334 = vunpack.c.l.b16 %v81
  %v335 = vunpack.c.l.b16 %v82
  %v336 = vunpack.c.l.b16 %v83
  %v337 = vunpack.c.l.b16 %v84
  %v338 = vunpack.c.l.b16 %v85
  %v339 = vunpack.c.l.b16 %v86
  %v340 = vunpack.c.l.b16 %v87
  %v341 = vunpack.c.l.b16 %v88
  %v342 = vunpack.c.l.b16 %v89
  %v343 = vunpack.c.l.b16 %v90
  %v344 = vunpack.c.l.b16 %v91
  %v345 = vunpack.c.l.b16 %v92
  %v346 = vunpack.c.l.b16 %v93
  %v347 = vunpack.c.l.b16 %v94
  %v348 = vunpack.c.l.b16 %v95
  %v349 = vunpack.c.l.b16 %v96
  %v350 = vunpack.c.l.b16 %v97
  %v351 = vunpack.c.l.b16 %v98
  %v352 = vunpack.c.l.b16 %v99
  %v353 = vunpack.c.l.b16 %v100
  %v354 = vunpack.c.l.b16 %v101
  %v355 = vunpack.c.l.b16 %v102
  %v356 = vunpack.c.l.b16 %v103
  %v357 = vunpack.c.l.b16 %v104
  %v358 = vunpack.c.l.b16 %v105
  %v359 = vunpack.c.l.b16 %v106
  %v360 = vunpack.c.l.b16 %v107
  %v361 = vunpack.c.l.b16 %v108
  %v362 = vunpack.c.l.b16 %v109
  %v363 = vunpack.c.l.b16 %v110
  %v364 = vunpack.c.l.b16 %v111
  %v365 = vunpack.c.l.b16 %v112
  %v366 = vunpack.c.l.b16 %v113
  %v367 = vunpack.c.l.b16 %v114
  %v368 = vunpack.c.l.b16 %v115
  %v369 = vunpack.c.l.b16 %v116
  %v370 = vunpack.c.l.b16 %v117
  %v371 = vunpack.c.l.b16 %v118
  %v372 = vunpack.c.l.b16 %v119
  %v373 = vunpack.c.l.b16 %v120
  %v374 = vunpack.c.l.b16 %v121
  %v375 = vunpack.c.l.b16 %v122
  %v376 = vunpack.c.l.b16 %v123
  %v377 = vunpack.c.l.b16 %v124
  %v378 = vunpack.c.l.b16 %v125
  %v379 = vunpack.c.l.b16 %v126
  %v380 = vunpack.c.l.b16 %v127
  %v381 = vunpack.c.l.b16 %v128
  %v382 = vunpack.c.l.b16 %v129
  %v383 = vunpack.c.l.b16 %v130
  %v384 = vunpack.c.l.b16 %v131
  %v385 = vunpack.c.l.b16 %v132
  %v386 = vunpack.c.l.b16 %v133
  %v387 = vunpack.c.l.b16 %v134
  %v388 = vunpack.c.l.b16 %v135
  %v389 = vunpack.c.l.b16 %v136
  %v390 = vunpack.c.l.b16 %v137
  %v391 = vunpack.c.l.b16 %v138
  %v392 = vunpack.c.l.b16 %v139
  %v393 = vunpack.c.l.b16 %v140
  %v394 = vunpack.c.l.b16 %v141
  %v395 = vunpack.c.l.b16 %v142
  %v396 = vunpack.c.l.b16 %v143
  %v397 = vunpack.c.l.b16 %v144
  %v398 = vunpack.c.l.b16 %v145
  %v399 = vunpack.c.l.b16 %v146
  %v400 = vunpack.c.l.b16 %v147
  %v401 = vunpack.c.l.b16 %v148
  %v402 = vunpack.c.l.b16 %v149
  %v403 = vunpack.c.l.b16 %v150
  %v404 = vunpack.c.l.b16 %v151
  %v405 = vunpack.c.l.b16 %v152
  %v406 = vunpack.c.l.b16 %v153
  %v407 = vunpack.c.l.b16 %v154
  %v408 = vunpack.c.l.b16 %v155
  %v409 = vunpack.c.l.b16 %v156
  %v410 = vunpack.c.l.b16 %v157
  %v411 = vunpack.c.l.b16 %v158
  %v412 = vunpack.c.l.b16 %v159
  %v413 = vunpack.c.l.b16 %v160
  %v414 = vunpack.c.l.b16 %v161
  %v415 = vunpack.c.l.b16 %v162
  %v416 = vunpack.c.l.b16 %v163
  %v417 = vunpack.c.l.b16 %v164
  %v418 = vunpack.c.l.b16 %v165
  %v419 = vunpack.c.l.b16 %v166
  %v420 = vunpack.c.l.b16 %v167
  %v421 = vunpack.c.l.b16 %v168
  %v422 = vpack.c.b16 %v311, %v310
  %v423 = vpack.c.b16 %v313, %v312
  %v424 = vpack.c.b16 %v315, %v314
  %v425 = vpack.c.b16 %v317, %v316
  %v426 = vpack.c.b16 %v319, %v318
  %v427 = vpack.c.b16 %v321, %v320
  %v428 = vpack.c.b16 %v323, %v322
  %v429 = vpack.c.b16 %v325, %v324
  %v430 = vpack.c.b16 %v327, %v326
  %v431 = vpack.c.b16 %v329, %v328
  %v432 = vpack.c.b16 %v331, %v330
  %v433 = vpack.c.b16 %v333, %v332
  %v434 = vpack.c.b16 %v335, %v334
  %v435 = vpack.c.b16 %v337, %v336
  %v436 = vpack.c.b16 %v339, %v338
  %v437 = vpack.c.b16 %v341, %v340
  %v438 = vpack.c.b16 %v343, %v342
  %v439 = vpack.c.b16 %v345, %v344
  %v440 = vpack.c.b16 %v347, %v346
  %v441 = vpack.c.b16 %v349, %v348
  %v442 = vpack.c.b16 %v351, %v350
  %v443 = vpack.c.b16 %v353, %v352
  %v444 = vpack.c.b16 %v355, %v354
  %v445 = vpack.c.b16 %v357, %v356
  %v446 = vpack.c.b16 %v359, %v358
  %v447 = vpack.c.b16 %v361, %v360
  %v448 = vpack.c.b16 %v363, %v362
  %v449 = vpack.c.b16 %v365, %v364
  %v450 = vpack.c.b16 %v367, %v366
  %v451 = vpack.c.b16 %v369, %v368
  %v452 = vpack.c.b16 %v371, %v370
  %v453 = vpack.c.b16 %v373, %v372
  %v454 = vpack.c.b16 %v375, %v374
  %v455 = vpack.c.b16 %v377, %v376
  %v456 = vpack.c.b16 %v379, %v378
  %v457 = vpack.c.b16 %v381, %v380
  %v458 = vpack.c.b16 %v383, %v382
  %v459 = vpack.c.b16 %v385, %v384
  %v460 = vpack.c.b16 %v387, %v386
  %v461 = vpack.c.b16 %v389, %v388
  %v462 = vpack.c.b16 %v391, %v390
  %v463 = vpack.c.b16 %v393, %v392
  %v464 = vpack.c.b16 %v395, %v394
  %v465 = vpack.c.b16 %v397, %v396
  %v466 = vpack.c.b16 %v399, %v398
  %v467 = vpack.c.b16 %v401, %v400
  %v468 = vpack.c.b16 %v403, %v402
  %v469 = vpack.c.b16 %v405, %v404
  %v470 = vpack.c.b16 %v407, %v406
  %v471 = vpack.c.b16 %v409, %v408
  %v472 = vpack.c.b16 %v411, %v410
  %v473 = vpack.c.b16 %v413, %v412
  %v474 = vpack.c.b16 %v415, %v414
  %v475 = vpack.c.b16 %v417, %v416
  %v476 = vpack.c.b16 %v419, %v418
  %v477 = vpack.c.b16 %v421, %v420
  %534 = vmatpush.bf16.msra.mxu0 %v429
  %535 = vmatpush.bf16.msra.mxu0 %v428
  %536 = vmatpush.bf16.msra.mxu0 %v427
  %537 = vmatpush.bf16.msra.mxu0 %v426
  %538 = vmatpush.bf16.msra.mxu0 %v425
  %539 = vmatpush.bf16.msra.mxu0 %v424
  %540 = vmatpush.bf16.msra.mxu0 %v423
  %541 = vmatpush.bf16.msra.mxu0 %v422
  %542 = vmatmul.bf16.gmra.mxu0 %v184
  %v543 = vpop.f32.mrf.mxu0
  %v544 = vadd.f32 %v171, %v543
  %v545 = vpop.f32.mrf.mxu0
  %546 = vdwg.mxu0
  %547 = vmatpush.bf16.msra.mxu0 %v437
  %548 = vmatpush.bf16.msra.mxu0 %v436
  %549 = vmatpush.bf16.msra.mxu0 %v435
  %550 = vmatpush.bf16.msra.mxu0 %v434
  %551 = vmatpush.bf16.msra.mxu0 %v433
  %552 = vmatpush.bf16.msra.mxu0 %v432
  %553 = vmatpush.bf16.msra.mxu0 %v431
  %554 = vmatpush.bf16.msra.mxu0 %v430
  %555 = vmatmul.bf16.gmra.mxu0 %v185
  %v556 = vpop.f32.mrf.mxu0
  %v557 = vadd.f32 %v544, %v556
  %v558 = vpop.f32.mrf.mxu0
  %559 = vdwg.mxu0
  %560 = vmatpush.bf16.msra.mxu0 %v445
  %561 = vmatpush.bf16.msra.mxu0 %v444
  %562 = vmatpush.bf16.msra.mxu0 %v443
  %563 = vmatpush.bf16.msra.mxu0 %v442
  %564 = vmatpush.bf16.msra.mxu0 %v441
  %565 = vmatpush.bf16.msra.mxu0 %v440
  %566 = vmatpush.bf16.msra.mxu0 %v439
  %567 = vmatpush.bf16.msra.mxu0 %v438
  %568 = vmatmul.bf16.gmra.mxu0 %v186
  %v569 = vpop.f32.mrf.mxu0
  %v570 = vadd.f32 %v557, %v569
  %v571 = vpop.f32.mrf.mxu0
  %572 = vdwg.mxu0
  %573 = vmatpush.bf16.msra.mxu0 %v453
  %574 = vmatpush.bf16.msra.mxu0 %v452
  %575 = vmatpush.bf16.msra.mxu0 %v451
  %576 = vmatpush.bf16.msra.mxu0 %v450
  %577 = vmatpush.bf16.msra.mxu0 %v449
  %578 = vmatpush.bf16.msra.mxu0 %v448
  %579 = vmatpush.bf16.msra.mxu0 %v447
  %580 = vmatpush.bf16.msra.mxu0 %v446
  %581 = vmatmul.bf16.gmra.mxu0 %v187
  %v582 = vpop.f32.mrf.mxu0
  %v583 = vadd.f32 %v570, %v582
  %v584 = vpop.f32.mrf.mxu0
  %585 = vdwg.mxu0
  %586 = vmatpush.bf16.msra.mxu0 %v461
  %587 = vmatpush.bf16.msra.mxu0 %v460
  %588 = vmatpush.bf16.msra.mxu0 %v459
  %589 = vmatpush.bf16.msra.mxu0 %v458
  %590 = vmatpush.bf16.msra.mxu0 %v457
  %591 = vmatpush.bf16.msra.mxu0 %v456
  %592 = vmatpush.bf16.msra.mxu0 %v455
  %593 = vmatpush.bf16.msra.mxu0 %v454
  %594 = vmatmul.bf16.gmra.mxu0 %v188
  %v595 = vpop.f32.mrf.mxu0
  %v596 = vadd.f32 %v583, %v595
  %v597 = vpop.f32.mrf.mxu0
  %598 = vdwg.mxu0
  %599 = vmatpush.bf16.msra.mxu0 %v469
  %600 = vmatpush.bf16.msra.mxu0 %v468
  %601 = vmatpush.bf16.msra.mxu0 %v467
  %602 = vmatpush.bf16.msra.mxu0 %v466
  %603 = vmatpush.bf16.msra.mxu0 %v465
  %604 = vmatpush.bf16.msra.mxu0 %v464
  %605 = vmatpush.bf16.msra.mxu0 %v463
  %606 = vmatpush.bf16.msra.mxu0 %v462
  %607 = vmatmul.bf16.gmra.mxu0 %v189
  %v608 = vpop.f32.mrf.mxu0
  %v609 = vadd.f32 %v596, %v608
  %v610 = vpop.f32.mrf.mxu0
  %611 = vdwg.mxu0
  %612 = vmatpush.bf16.msra.mxu0 %v477
  %613 = vmatpush.bf16.msra.mxu0 %v476
  %614 = vmatpush.bf16.msra.mxu0 %v475
  %615 = vmatpush.bf16.msra.mxu0 %v474
  %616 = vmatpush.bf16.msra.mxu0 %v473
  %617 = vmatpush.bf16.msra.mxu0 %v472
  %618 = vmatpush.bf16.msra.mxu0 %v471
  %619 = vmatpush.bf16.msra.mxu0 %v470
  %620 = vmatmul.bf16.gmra.mxu0 %v190
  %v621 = vpop.f32.mrf.mxu0
  %v622 = vadd.f32 %v609, %v621
  %v623 = vpop.f32.mrf.mxu0
  %624 = vdwg.mxu0
  %vm625 = vcmp.gt.f32.partialorder %v622, 0.0
  %v626 = vmul.f32 %v622, 0.2
  %v627 = vsel %vm625, %v622, %v626
  %v628 = vpack.c.bf16 %v627, %v627
  %v629 = vld [vmem:[%s3] sm:$0xf]
  %v630 = vld [vmem:[%s3 + $0x4] sm:$0xf]
  %v631 = vld [vmem:[%s3 + $0x8] sm:$0xf]
  %v632 = vld [vmem:[%s3 + $0xc] sm:$0xf]
  %v633 = vld [vmem:[%s3 + $0x10] sm:$0xf]
  %v634 = vld [vmem:[%s3 + $0x14] sm:$0xf]
  %v635 = vld [vmem:[%s3 + $0x18] sm:$0xf]
  %v636 = vld [vmem:[%s3 + $0x1c] sm:$0xf]
  %v637 = vld [vmem:[%s3 + $0x20] sm:$0xf]
  %v638 = vld [vmem:[%s3 + $0x24] sm:$0xf]
  %v639 = vld [vmem:[%s3 + $0x28] sm:$0xf]
  %v640 = vld [vmem:[%s3 + $0x2c] sm:$0xf]
  %v641 = vld [vmem:[%s3 + $0x30] sm:$0xf]
  %v642 = vld [vmem:[%s3 + $0x34] sm:$0xf]
  %v643 = vld [vmem:[%s3 + $0x38] sm:$0xf]
  %v644 = vld [vmem:[%s3 + $0x3c] sm:$0xf]
  %v645 = vld [vmem:[%s4] sm:$0x1]
  %v647 = vperm.slane %v645, 0
  %v665 = vunpack.c.l.b16 %v629
  %v666 = vunpack.c.l.b16 %v630
  %v667 = vunpack.c.l.b16 %v631
  %v668 = vunpack.c.l.b16 %v632
  %v669 = vunpack.c.l.b16 %v633
  %v670 = vunpack.c.l.b16 %v634
  %v671 = vunpack.c.l.b16 %v635
  %v672 = vunpack.c.l.b16 %v636
  %v673 = vunpack.c.l.b16 %v637
  %v674 = vunpack.c.l.b16 %v638
  %v675 = vunpack.c.l.b16 %v639
  %v676 = vunpack.c.l.b16 %v640
  %v677 = vunpack.c.l.b16 %v641
  %v678 = vunpack.c.l.b16 %v642
  %v679 = vunpack.c.l.b16 %v643
  %v680 = vunpack.c.l.b16 %v644
  %v681 = vpack.c.b16 %v666, %v665
  %v682 = vpack.c.b16 %v668, %v667
  %v683 = vpack.c.b16 %v670, %v669
  %v684 = vpack.c.b16 %v672, %v671
  %v685 = vpack.c.b16 %v674, %v673
  %v686 = vpack.c.b16 %v676, %v675
  %v687 = vpack.c.b16 %v678, %v677
  %v688 = vpack.c.b16 %v680, %v679
  %697 = vmatpush.bf16.msra.mxu0 %v688
  %698 = vmatpush.bf16.msra.mxu0 %v687
  %699 = vmatpush.bf16.msra.mxu0 %v686
  %700 = vmatpush.bf16.msra.mxu0 %v685
  %701 = vmatpush.bf16.msra.mxu0 %v684
  %702 = vmatpush.bf16.msra.mxu0 %v683
  %703 = vmatpush.bf16.msra.mxu0 %v682
  %704 = vmatpush.bf16.msra.mxu0 %v681
  %705 = vmatmul.bf16.gmra.mxu0 %v628
  %v706 = vpop.f32.mrf.mxu0
  %v707 = vadd.f32 %v647, %v706
  %v708 = vpop.f32.mrf.mxu0
  %709 = vdwg.mxu0
  %vm710 = vcmp.gt.f32.partialorder %v707, 0.0
  %v711 = vmul.f32 %v707, 0.2
  %v712 = vsel %vm710, %v707, %v711
  %v713 = vpack.c.bf16 %v712, %v712
  %v714 = vld [vmem:[%s5] sm:$0xf]
  %v715 = vld [vmem:[%s5 + $0x4] sm:$0xf]
  %v716 = vld [vmem:[%s5 + $0x8] sm:$0xf]
  %v717 = vld [vmem:[%s5 + $0xc] sm:$0xf]
  %v718 = vld [vmem:[%s5 + $0x10] sm:$0xf]
  %v719 = vld [vmem:[%s5 + $0x14] sm:$0xf]
  %v720 = vld [vmem:[%s5 + $0x18] sm:$0xf]
  %v721 = vld [vmem:[%s5 + $0x1c] sm:$0xf]
  %v722 = vld [vmem:[%s6] sm:$0x1]
  %v724 = vperm.slane %v722, 0
  %v734 = vunpack.c.l.b16 %v714
  %v735 = vunpack.c.l.b16 %v715
  %v736 = vunpack.c.l.b16 %v716
  %v737 = vunpack.c.l.b16 %v717
  %v738 = vunpack.c.l.b16 %v718
  %v739 = vunpack.c.l.b16 %v719
  %v740 = vunpack.c.l.b16 %v720
  %v741 = vunpack.c.l.b16 %v721
  %v742 = vpack.c.b16 %v735, %v734
  %v743 = vpack.c.b16 %v737, %v736
  %v744 = vpack.c.b16 %v739, %v738
  %v745 = vpack.c.b16 %v741, %v740
  %vm750 = vcmask 523264
  %v752 = vsel %vm750, %v713, 0
  %754 = vmatpush.bf16.msra.mxu0 0
  %755 = vmatpush.bf16.msra.mxu0 0
  %756 = vmatpush.bf16.msra.mxu0 0
  %757 = vmatpush.bf16.msra.mxu0 0
  %758 = vmatpush.bf16.msra.mxu0 %v745
  %759 = vmatpush.bf16.msra.mxu0 %v744
  %760 = vmatpush.bf16.msra.mxu0 %v743
  %761 = vmatpush.bf16.msra.mxu0 %v742
  %762 = vmatmul.bf16.gmra.mxu0 %v752
  %v763 = vpop.f32.mrf.mxu0
  %v764 = vadd.f32 %v724, %v763
  %v765 = vpop.f32.mrf.mxu0
  %766 = vdwg.mxu0
  %vm767 = vcmp.gt.f32.partialorder %v764, 0.0
  %v768 = vmul.f32 %v764, 0.2
  %v769 = vsel %vm767, %v764, %v768
  %v770 = vld [vmem:[%s7] sm:$0x1]
  %v772 = vperm.slane %v770, 0
  %v774 = vmul.f32 %v769, %v772
  %vm775 = vcmask 261120
  %v776 = vsel %vm775, %v774, 0.0
  %777 = vadd.xlane.f32.xlu0 %v776
  %v778 = vpop.xlane.xlu0 %777
  %v779 = vld [vmem:[#allocation3] sm:$0x1]
  %v781 = vperm.slane %v779, 0
  %v783 = vadd.f32 %v778, %v781
  %vm784 = vcmask 7168
  %785 = vst.msk [vmem:[%s9] sm:$0xff] %vm784, %v783
  // Predicated region
  $region38: #{discriminator_forward.1} parent=0 // pred_check
    _
  $region39: #{discriminator_forward.1} parent=0 // pred_check_branch
    %787 = sbr.rel (0) target = $region41
  $region40: #{discriminator_forward.1} parent=0 // pred_region
    _
  $region41: #{discriminator_forward.1} parent=0 // pred_fallthru
    _
  // Predicated region
  $region42: #{discriminator_forward.1} parent=0 // pred_check
    _
  $region43: #{discriminator_forward.1} parent=0 // pred_check_branch
    %789 = sbr.rel (0) target = $region45
  $region44: #{discriminator_forward.1} parent=0 // pred_region
    _
  $region45: #{discriminator_forward.1} parent=0 // pred_fallthru
    _

</llo_original>
